<compile_context>
chip_gen: v5e
topology: v5e:2x2
jax: 0.10.0
libtpu: 0.0.40
codegen_flags: <defaults>
</compile_context>

<pallas_src>
import jax
import jax.numpy as jnp
from jax.experimental import pallas as pl
from jax.experimental.pallas import tpu as pltpu


def _round_up(n, m):
    return ((n + m - 1) // m) * m


def _critic_kernel(s_ref, a_ref, w1s_ref, w1a_ref, b1_ref, w2_ref, b2_ref,
                   w3_ref, o_ref):
    """One batch tile: states (TB, Ds) + actions (TB, Da) -> q (TB, 1)."""
    cdt = w1s_ref.dtype  # MXU compute dtype (bf16 by default)

    # Layer 1: the torch.cat is fused as two accumulating MXU pushes onto the
    # same f32 tile (same MXU time as one fused push, no wrapper concat/copy).
    h1 = jnp.dot(s_ref[...].astype(cdt), w1s_ref[...],
                 preferred_element_type=jnp.float32)
    h1 = h1 + jnp.dot(a_ref[...].astype(cdt), w1a_ref[...],
                      preferred_element_type=jnp.float32)
    h1 = jnp.maximum(h1 + b1_ref[...], 0.0)          # bias + ReLU in f32 (VPU)

    # Layer 2: Linear + ReLU.
    h2 = jnp.dot(h1.astype(cdt), w2_ref[...],
                 preferred_element_type=jnp.float32) + b2_ref[...]
    h2 = jnp.maximum(h2, 0.0)

    # Layer 3: Linear(H, 1).  Output width 1 would burn a full MXU push for a
    # single useful column, so do it on the VPU (mul) + XLU (lane reduce).
    # The reduction naturally leaves one value per sublane row, so a (TB, 1)
    # store needs no transpose; the writeback is tiny (~TB*4 bytes).
    q = jnp.sum(h2 * w3_ref[...], axis=-1, keepdims=True)   # (TB, 1) f32
    o_ref[...] = q.astype(o_ref.dtype)


def preprocess_params(params, state_dim, compute_dtype=jnp.bfloat16):
    """One-time (per parameter update) weight preprocessing.

    Casts MXU weights to `compute_dtype`, splits w1 into its state/action row
    blocks, and reshapes biases — so the per-step forward does zero weight
    casts or HBM round trips.  Cache the result across training steps.
    """
    w1, b1, w2, b2, w3, b3 = params
    H = w1.shape[1]
    w1s = jnp.asarray(w1[:state_dim], compute_dtype)     # (Ds, H)
    w1a = jnp.asarray(w1[state_dim:], compute_dtype)     # (Da, H)
    w2c = jnp.asarray(w2, compute_dtype)                 # (H, H)
    b1r = jnp.asarray(b1, jnp.float32).reshape(1, H)
    b2r = jnp.asarray(b2, jnp.float32).reshape(1, H)
    w3r = jnp.asarray(w3, jnp.float32).reshape(1, H)     # used on the VPU: keep f32
    b3s = jnp.asarray(b3, jnp.float32).reshape(1, 1)     # added in the wrapper
    return (w1s, w1a, b1r, w2c, b2r, w3r, b3s)


def _choose_tiles(B, block_b):
    """Balanced batch tiles; >= 2 grid steps when B > 128 (v7x megacore)."""
    num_tiles = max(pl.cdiv(B, block_b), 1)
    if B > 128:
        num_tiles = max(num_tiles, 2)
    tb = _round_up(pl.cdiv(B, num_tiles), 128)
    num_tiles = pl.cdiv(B, tb)
    if B > 128:
        num_tiles = max(num_tiles, 2)
    bp = num_tiles * tb
    return tb, bp, num_tiles


def critic_forward(states, actions, prepped_params, *, block_b=512):
    """states: [B, Ds], actions: [B, Da]  ->  q: [B, 1] (float32).

    `prepped_params` comes from `preprocess_params` (call once, reuse every step).
    """
    w1s, w1a, b1r, w2c, b2r, w3r, b3s = prepped_params
    B, Ds = states.shape
    Da = actions.shape[1]
    H = w1s.shape[1]
    assert w1s.shape[0] == Ds and w1a.shape[0] == Da
    assert block_b >= 128

    tb, bp, num_tiles = _choose_tiles(B, block_b)

    # Zero-pad the batch only when B isn't tile-aligned (padded rows produce
    # garbage q values that are sliced off below).  For aligned B there is no
    # wrapper-side copy at all.
    if bp != B:
        states = jnp.pad(states, ((0, bp - B), (0, 0)))
        actions = jnp.pad(actions, ((0, bp - B), (0, 0)))

    # VMEM footprint estimate; raise the scoped-VMEM limit (16 MiB default on
    # v5e) only when needed, capped at v7x's 64 MiB physical VMEM.
    in_isz = jnp.dtype(states.dtype).itemsize
    cdt_isz = jnp.dtype(w1s.dtype).itemsize
    vmem_est = (
        2 * tb * (Ds + Da) * in_isz            # double-buffered activation tiles
        + 2 * ((Ds + Da) * H + H * H) * cdt_isz  # double-buffered weight blocks
        + 2 * 3 * H * 4                        # b1 / b2 / w3 rows (f32)
        + 2 * tb * 4                           # output blocks
        + 4 * tb * H * 4                       # h1/h2 intermediates + headroom
    )
    vmem_limit = None
    if vmem_est > (14 << 20):
        vmem_limit = int(min(2 * vmem_est, 64 << 20))

    out = pl.pallas_call(
        _critic_kernel,
        out_shape=jax.ShapeDtypeStruct((bp, 1), jnp.float32),
        grid_spec=pltpu.PrefetchScalarGridSpec(
            num_scalar_prefetch=0,
            grid=(num_tiles,),
            in_specs=[
                pl.BlockSpec((tb, Ds), lambda i: (i, 0)),   # batch-tiled states
                pl.BlockSpec((tb, Da), lambda i: (i, 0)),   # batch-tiled actions
                pl.BlockSpec((Ds, H), lambda i: (0, 0)),    # w1[:Ds]  (VMEM-resident)
                pl.BlockSpec((Da, H), lambda i: (0, 0)),    # w1[Ds:]
                pl.BlockSpec((1, H), lambda i: (0, 0)),     # b1
                pl.BlockSpec((H, H), lambda i: (0, 0)),     # w2
                pl.BlockSpec((1, H), lambda i: (0, 0)),     # b2
                pl.BlockSpec((1, H), lambda i: (0, 0)),     # w3 (row vector)
            ],
            out_specs=pl.BlockSpec((tb, 1), lambda i: (i, 0)),
        ),
        compiler_params=pltpu.CompilerParams(
            # Batch axis is embarrassingly parallel -> megacore sharding (v7x).
            dimension_semantics=("parallel",),
            vmem_limit_bytes=vmem_limit,
        ),
    )(states, actions, w1s, w1a, b1r, w2c, b2r, w3r)

    # Final bias add on the sliced result (free in XLA; avoids a (1,1) VMEM
    # block + DMA inside the kernel).
    return out[:B] + b3s


def init_params(key, state_dim, action_dim, hidden):
    """Deterministic synthetic init (uniform, fan-in scaled) for the MLP
       Linear(Ds+Da, H) -> ReLU -> Linear(H, H) -> ReLU -> Linear(H, 1),
       with weights stored [in_features, out_features]."""
    ks = jax.random.split(key, 6)
    din = state_dim + action_dim

    def u(k, shape, fan_in):
        bound = 1.0 / jnp.sqrt(jnp.float32(fan_in))
        return jax.random.uniform(k, shape, jnp.float32, -bound, bound)

    w1 = u(ks[0], (din, hidden), din)
    b1 = u(ks[1], (hidden,), din)
    w2 = u(ks[2], (hidden, hidden), hidden)
    b2 = u(ks[3], (hidden,), hidden)
    w3 = u(ks[4], (hidden, 1), hidden)
    b3 = u(ks[5], (1,), hidden)
    return (w1, b1, w2, b2, w3, b3)


def reference_forward(states, actions, params, compute_dtype=jnp.bfloat16):
    """Pure-JAX reference mirroring the kernel's bf16-operand / f32-accum math."""
    (w1, b1, w2, b2, w3, b3) = params
    x = jnp.concatenate([states, actions], axis=1)
    h1 = jax.nn.relu(
        jnp.dot(x.astype(compute_dtype), w1.astype(compute_dtype),
                preferred_element_type=jnp.float32) + b1.reshape(1, -1))
    h2 = jax.nn.relu(
        jnp.dot(h1.astype(compute_dtype), w2.astype(compute_dtype),
                preferred_element_type=jnp.float32) + b2.reshape(1, -1))
    return jnp.dot(h2, w3) + b3.reshape(1, 1)


if __name__ == "__main__":
    B, Ds, Da, H = 8, 16, 8, 32

    key = jax.random.PRNGKey(0)
    k_s, k_a, k_p = jax.random.split(key, 3)
    states = jax.random.normal(k_s, (B, Ds), jnp.float32)
    actions = jax.random.normal(k_a, (B, Da), jnp.float32)
    params = init_params(k_p, Ds, Da, H)

    # Hoisted once per parameter update (cache this across training steps).
    prepped = preprocess_params(params, Ds)

    fwd = jax.jit(critic_forward)
    q = jax.block_until_ready(fwd(states, actions, prepped))

    q_ref = reference_forward(states, actions, params)
    assert q.shape == (B, 1), q.shape
    max_err = float(jnp.max(jnp.abs(q - q_ref)))
    assert jnp.allclose(q, q_ref, atol=2e-2, rtol=2e-2), f"mismatch, max err {max_err}"

    print("KERNEL_OK")
</pallas_src>

<mosaic_0001>
module attributes {stable_mosaic.version = 11 : i64} {
  func.func @_critic_kernel(%arg0: i32, %arg1: memref<128x16xf32, #tpu.memory_space<vmem>>, %arg2: memref<128x8xf32, #tpu.memory_space<vmem>>, %arg3: memref<16x32xbf16, #tpu.memory_space<vmem>>, %arg4: memref<8x32xbf16, #tpu.memory_space<vmem>>, %arg5: memref<1x32xf32, #tpu.memory_space<vmem>>, %arg6: memref<32x32xbf16, #tpu.memory_space<vmem>>, %arg7: memref<1x32xf32, #tpu.memory_space<vmem>>, %arg8: memref<1x32xf32, #tpu.memory_space<vmem>>, %arg9: memref<128x1xf32, #tpu.memory_space<vmem>>) attributes {dimension_semantics = [#tpu.dimension_semantics<parallel>], iteration_bounds = array<i64: 1>, scalar_prefetch = 0 : i64, scratch_operands = 0 : i64, tpu.core_type = #tpu.core_type<tc>, window_params = [{transform_indices = @transform_0, window_bounds = array<i64: 128, 16>}, {transform_indices = @transform_1, window_bounds = array<i64: 128, 8>}, {pipeline_mode = #tpu.pipeline_mode<synchronous>, transform_indices = @transform_2, window_bounds = array<i64: 16, 32>}, {pipeline_mode = #tpu.pipeline_mode<synchronous>, transform_indices = @transform_3, window_bounds = array<i64: 8, 32>}, {pipeline_mode = #tpu.pipeline_mode<synchronous>, transform_indices = @transform_4, window_bounds = array<i64: 1, 32>}, {pipeline_mode = #tpu.pipeline_mode<synchronous>, transform_indices = @transform_5, window_bounds = array<i64: 32, 32>}, {pipeline_mode = #tpu.pipeline_mode<synchronous>, transform_indices = @transform_6, window_bounds = array<i64: 1, 32>}, {pipeline_mode = #tpu.pipeline_mode<synchronous>, transform_indices = @transform_7, window_bounds = array<i64: 1, 32>}, {transform_indices = @transform_8, window_bounds = array<i64: 128, 1>}]} {
    %c0 = arith.constant 0 : index
    %c0_0 = arith.constant 0 : index
    %0 = vector.load %arg1[%c0, %c0_0] : memref<128x16xf32, #tpu.memory_space<vmem>>, vector<128x16xf32>
    %1 = arith.truncf %0 : vector<128x16xf32> to vector<128x16xbf16>
    %c0_1 = arith.constant 0 : index
    %c0_2 = arith.constant 0 : index
    %2 = vector.load %arg3[%c0_1, %c0_2] : memref<16x32xbf16, #tpu.memory_space<vmem>>, vector<16x32xbf16>
    %cst = arith.constant dense<0.000000e+00> : vector<128x32xf32>
    %3 = tpu.matmul %1, %2, %cst {dimension_numbers = #tpu.dot_dimension_numbers<[1], [0], [0], [1], [0, 0, 1, 1], [], []>} : vector<128x16xbf16>, vector<16x32xbf16>, vector<128x32xf32> -> vector<128x32xf32>
    %c0_3 = arith.constant 0 : index
    %c0_4 = arith.constant 0 : index
    %4 = vector.load %arg2[%c0_3, %c0_4] : memref<128x8xf32, #tpu.memory_space<vmem>>, vector<128x8xf32>
    %5 = arith.truncf %4 : vector<128x8xf32> to vector<128x8xbf16>
    %c0_5 = arith.constant 0 : index
    %c0_6 = arith.constant 0 : index
    %6 = vector.load %arg4[%c0_5, %c0_6] : memref<8x32xbf16, #tpu.memory_space<vmem>>, vector<8x32xbf16>
    %cst_7 = arith.constant dense<0.000000e+00> : vector<128x32xf32>
    %7 = tpu.matmul %5, %6, %cst_7 {dimension_numbers = #tpu.dot_dimension_numbers<[1], [0], [0], [1], [0, 0, 1, 1], [], []>} : vector<128x8xbf16>, vector<8x32xbf16>, vector<128x32xf32> -> vector<128x32xf32>
    %8 = arith.addf %3, %7 : vector<128x32xf32>
    %c0_8 = arith.constant 0 : index
    %c0_9 = arith.constant 0 : index
    %9 = vector.load %arg5[%c0_8, %c0_9] : memref<1x32xf32, #tpu.memory_space<vmem>>, vector<1x32xf32>
    %10 = vector.broadcast %9 : vector<1x32xf32> to vector<128x32xf32>
    %11 = arith.addf %8, %10 : vector<128x32xf32>
    %cst_10 = arith.constant 0.000000e+00 : f32
    %12 = vector.broadcast %cst_10 : f32 to vector<128x32xf32>
    %13 = arith.maximumf %11, %12 : vector<128x32xf32>
    %14 = arith.truncf %13 : vector<128x32xf32> to vector<128x32xbf16>
    %c0_11 = arith.constant 0 : index
    %c0_12 = arith.constant 0 : index
    %15 = vector.load %arg6[%c0_11, %c0_12] : memref<32x32xbf16, #tpu.memory_space<vmem>>, vector<32x32xbf16>
    %cst_13 = arith.constant dense<0.000000e+00> : vector<128x32xf32>
    %16 = tpu.matmul %14, %15, %cst_13 {dimension_numbers = #tpu.dot_dimension_numbers<[1], [0], [0], [1], [0, 0, 1, 1], [], []>} : vector<128x32xbf16>, vector<32x32xbf16>, vector<128x32xf32> -> vector<128x32xf32>
    %c0_14 = arith.constant 0 : index
    %c0_15 = arith.constant 0 : index
    %17 = vector.load %arg7[%c0_14, %c0_15] : memref<1x32xf32, #tpu.memory_space<vmem>>, vector<1x32xf32>
    %18 = vector.broadcast %17 : vector<1x32xf32> to vector<128x32xf32>
    %19 = arith.addf %16, %18 : vector<128x32xf32>
    %cst_16 = arith.constant 0.000000e+00 : f32
    %20 = vector.broadcast %cst_16 : f32 to vector<128x32xf32>
    %21 = arith.maximumf %19, %20 : vector<128x32xf32>
    %c0_17 = arith.constant 0 : index
    %c0_18 = arith.constant 0 : index
    %22 = vector.load %arg8[%c0_17, %c0_18] : memref<1x32xf32, #tpu.memory_space<vmem>>, vector<1x32xf32>
    %23 = vector.broadcast %22 : vector<1x32xf32> to vector<128x32xf32>
    %24 = arith.mulf %21, %23 : vector<128x32xf32>
    %cst_19 = arith.constant dense<0.000000e+00> : vector<128xf32>
    %25 = vector.multi_reduction <add>, %24, %cst_19 [1] : vector<128x32xf32> to vector<128xf32>
    %26 = vector.shape_cast %25 : vector<128xf32> to vector<128x1xf32>
    %c0_20 = arith.constant 0 : index
    %c0_21 = arith.constant 0 : index
    %27 = vector.load %arg9[%c0_20, %c0_21] : memref<128x1xf32, #tpu.memory_space<vmem>>, vector<128x1xf32>
    tpu.vector_store %arg9[%c0_20, %c0_21], %26 {strides = array<i32>} : memref<128x1xf32, #tpu.memory_space<vmem>>, vector<128x1xf32>,
    return
  }
  func.func @transform_0(%arg0: i32) -> (i32, i32) {
    %c0_i32 = arith.constant 0 : i32
    %c0_i32_0 = arith.constant 0 : i32
    return %arg0, %c0_i32 : i32, i32
  }
  func.func @transform_1(%arg0: i32) -> (i32, i32) {
    %c0_i32 = arith.constant 0 : i32
    %c0_i32_0 = arith.constant 0 : i32
    return %arg0, %c0_i32 : i32, i32
  }
  func.func @transform_2(%arg0: i32) -> (i32, i32) {
    %c0_i32 = arith.constant 0 : i32
    %c0_i32_0 = arith.constant 0 : i32
    %c0_i32_1 = arith.constant 0 : i32
    return %c0_i32, %c0_i32_0 : i32, i32
  }
  func.func @transform_3(%arg0: i32) -> (i32, i32) {
    %c0_i32 = arith.constant 0 : i32
    %c0_i32_0 = arith.constant 0 : i32
    %c0_i32_1 = arith.constant 0 : i32
    return %c0_i32, %c0_i32_0 : i32, i32
  }
  func.func @transform_4(%arg0: i32) -> (i32, i32) {
    %c0_i32 = arith.constant 0 : i32
    %c0_i32_0 = arith.constant 0 : i32
    %c0_i32_1 = arith.constant 0 : i32
    return %c0_i32, %c0_i32_0 : i32, i32
  }
  func.func @transform_5(%arg0: i32) -> (i32, i32) {
    %c0_i32 = arith.constant 0 : i32
    %c0_i32_0 = arith.constant 0 : i32
    %c0_i32_1 = arith.constant 0 : i32
    return %c0_i32, %c0_i32_0 : i32, i32
  }
  func.func @transform_6(%arg0: i32) -> (i32, i32) {
    %c0_i32 = arith.constant 0 : i32
    %c0_i32_0 = arith.constant 0 : i32
    %c0_i32_1 = arith.constant 0 : i32
    return %c0_i32, %c0_i32_0 : i32, i32
  }
  func.func @transform_7(%arg0: i32) -> (i32, i32) {
    %c0_i32 = arith.constant 0 : i32
    %c0_i32_0 = arith.constant 0 : i32
    %c0_i32_1 = arith.constant 0 : i32
    return %c0_i32, %c0_i32_0 : i32, i32
  }
  func.func @transform_8(%arg0: i32) -> (i32, i32) {
    %c0_i32 = arith.constant 0 : i32
    %c0_i32_0 = arith.constant 0 : i32
    return %arg0, %c0_i32 : i32, i32
  }
}

</mosaic_0001>

<llo_original>
// kernel: critic_forward.1
$region0: #{critic_forward.1}
  #allocation0 [shape = 'u32[]', space=smem, size = 0x4, offset = 0x4, fixed_abs, tag = 'smem constant byte address 0x4 - core index']
  #allocation1 [shape = 'u32[72,128]{1,0:T(1,128)}', space=vmem, size = 0x9000, scoped, tag = 'internal scratch']
  %s0 = inlined_call_operand.vmem [shape: f32[128,16], index: 0, kind: input, shape index: {}]
  %s1 = inlined_call_operand.vmem [shape: f32[128,8], index: 1, kind: input, shape index: {}]
  %s2 = inlined_call_operand.vmem [shape: bf16[16,32], index: 2, kind: input, shape index: {}]
  %s3 = inlined_call_operand.vmem [shape: bf16[8,32], index: 3, kind: input, shape index: {}]
  %s4 = inlined_call_operand.vmem [shape: f32[1,32], index: 4, kind: input, shape index: {}]
  %s5 = inlined_call_operand.vmem [shape: bf16[32,32], index: 5, kind: input, shape index: {}]
  %s6 = inlined_call_operand.vmem [shape: f32[1,32], index: 6, kind: input, shape index: {}]
  %s7 = inlined_call_operand.vmem [shape: f32[1,32], index: 7, kind: input, shape index: {}]
  %s8 = inlined_call_operand.vmem [shape: f32[128,1], index: 8, kind: output, shape index: {}]
  %s9 = sld [smem:[#allocation0]]
  $region42: #{critic_forward.1} parent=0
    _
  %s11 = ssub.s32 1, %s9
  %s12 = scalar_select 0, %s11, %s9
  // Predicated region
  $region2: #{critic_forward.1} parent=0 // pred_check
    _
  $region3: #{critic_forward.1} parent=0 // pred_check_branch
    %14 = sbr.rel (0) target = $region5
  $region4: #{critic_forward.1} parent=0 // pred_region
    _
  $region5: #{critic_forward.1} parent=0 // pred_fallthru
    _
  // Predicated region
  $region6: #{critic_forward.1} parent=0 // pred_check
    _
  $region7: #{critic_forward.1} parent=0 // pred_check_branch
    %16 = sbr.rel (0) target = $region9
  $region8: #{critic_forward.1} parent=0 // pred_region
    _
  $region9: #{critic_forward.1} parent=0 // pred_fallthru
    _
  // Predicated region
  $region10: #{critic_forward.1} parent=0 // pred_check
    _
  $region11: #{critic_forward.1} parent=0 // pred_check_branch
    %18 = sbr.rel (0) target = $region13
  $region12: #{critic_forward.1} parent=0 // pred_region
    _
  $region13: #{critic_forward.1} parent=0 // pred_fallthru
    _
  // Predicated region
  $region14: #{critic_forward.1} parent=0 // pred_check
    _
  $region15: #{critic_forward.1} parent=0 // pred_check_branch
    %20 = sbr.rel (0) target = $region17
  $region16: #{critic_forward.1} parent=0 // pred_region
    _
  $region17: #{critic_forward.1} parent=0 // pred_fallthru
    _
  // Predicated region
  $region18: #{critic_forward.1} parent=0 // pred_check
    _
  $region19: #{critic_forward.1} parent=0 // pred_check_branch
    %22 = sbr.rel (0) target = $region21
  $region20: #{critic_forward.1} parent=0 // pred_region
    _
  $region21: #{critic_forward.1} parent=0 // pred_fallthru
    _
  // Predicated region
  $region22: #{critic_forward.1} parent=0 // pred_check
    _
  $region23: #{critic_forward.1} parent=0 // pred_check_branch
    %24 = sbr.rel (0) target = $region25
  $region24: #{critic_forward.1} parent=0 // pred_region
    _
  $region25: #{critic_forward.1} parent=0 // pred_fallthru
    _
  // Predicated region
  $region26: #{critic_forward.1} parent=0 // pred_check
    _
  $region27: #{critic_forward.1} parent=0 // pred_check_branch
    %26 = sbr.rel (0) target = $region29
  $region28: #{critic_forward.1} parent=0 // pred_region
    _
  $region29: #{critic_forward.1} parent=0 // pred_fallthru
    _
  // Predicated region
  $region30: #{critic_forward.1} parent=0 // pred_check
    _
  $region31: #{critic_forward.1} parent=0 // pred_check_branch
    %28 = sbr.rel (0) target = $region33
  $region32: #{critic_forward.1} parent=0 // pred_region
    _
  $region33: #{critic_forward.1} parent=0 // pred_fallthru
    _
  %v30 = vld [vmem:[%s0] sm:$0xff]
  %v31 = vld [vmem:[%s0 + $0x8] sm:$0xff]
  %v32 = vld [vmem:[%s0 + $0x10] sm:$0xff]
  %v33 = vld [vmem:[%s0 + $0x18] sm:$0xff]
  %v34 = vld [vmem:[%s0 + $0x20] sm:$0xff]
  %v35 = vld [vmem:[%s0 + $0x28] sm:$0xff]
  %v36 = vld [vmem:[%s0 + $0x30] sm:$0xff]
  %v37 = vld [vmem:[%s0 + $0x38] sm:$0xff]
  %v38 = vld [vmem:[%s0 + $0x40] sm:$0xff]
  %v39 = vld [vmem:[%s0 + $0x48] sm:$0xff]
  %v40 = vld [vmem:[%s0 + $0x50] sm:$0xff]
  %v41 = vld [vmem:[%s0 + $0x58] sm:$0xff]
  %v42 = vld [vmem:[%s0 + $0x60] sm:$0xff]
  %v43 = vld [vmem:[%s0 + $0x68] sm:$0xff]
  %v44 = vld [vmem:[%s0 + $0x70] sm:$0xff]
  %v45 = vld [vmem:[%s0 + $0x78] sm:$0xff]
  %v46 = vpack.c.bf16 %v31, %v30
  %v47 = vpack.c.bf16 %v33, %v32
  %v48 = vpack.c.bf16 %v35, %v34
  %v49 = vpack.c.bf16 %v37, %v36
  %v50 = vpack.c.bf16 %v39, %v38
  %v51 = vpack.c.bf16 %v41, %v40
  %v52 = vpack.c.bf16 %v43, %v42
  %v53 = vpack.c.bf16 %v45, %v44
  %v54 = vld [vmem:[%s2] sm:$0xf]
  %v55 = vld [vmem:[%s2 + $0x4] sm:$0xf]
  %v56 = vld [vmem:[%s1] sm:$0xff]
  %v57 = vld [vmem:[%s1 + $0x8] sm:$0xff]
  %v58 = vld [vmem:[%s1 + $0x10] sm:$0xff]
  %v59 = vld [vmem:[%s1 + $0x18] sm:$0xff]
  %v60 = vld [vmem:[%s1 + $0x20] sm:$0xff]
  %v61 = vld [vmem:[%s1 + $0x28] sm:$0xff]
  %v62 = vld [vmem:[%s1 + $0x30] sm:$0xff]
  %v63 = vld [vmem:[%s1 + $0x38] sm:$0xff]
  %v64 = vld [vmem:[%s1 + $0x40] sm:$0xff]
  %v65 = vld [vmem:[%s1 + $0x48] sm:$0xff]
  %v66 = vld [vmem:[%s1 + $0x50] sm:$0xff]
  %v67 = vld [vmem:[%s1 + $0x58] sm:$0xff]
  %v68 = vld [vmem:[%s1 + $0x60] sm:$0xff]
  %v69 = vld [vmem:[%s1 + $0x68] sm:$0xff]
  %v70 = vld [vmem:[%s1 + $0x70] sm:$0xff]
  %v71 = vld [vmem:[%s1 + $0x78] sm:$0xff]
  %v72 = vpack.c.bf16 %v57, %v56
  %v73 = vpack.c.bf16 %v59, %v58
  %v74 = vpack.c.bf16 %v61, %v60
  %v75 = vpack.c.bf16 %v63, %v62
  %v76 = vpack.c.bf16 %v65, %v64
  %v77 = vpack.c.bf16 %v67, %v66
  %v78 = vpack.c.bf16 %v69, %v68
  %v79 = vpack.c.bf16 %v71, %v70
  %v80 = vld [vmem:[%s3] sm:$0xf]
  %vm81 = vcmask 64512
  %v83 = vsel %vm81, %v72, 0
  %v86 = vsel %vm81, %v73, 0
  %v89 = vsel %vm81, %v74, 0
  %v92 = vsel %vm81, %v75, 0
  %v95 = vsel %vm81, %v76, 0
  %v98 = vsel %vm81, %v77, 0
  %v101 = vsel %vm81, %v78, 0
  %v104 = vsel %vm81, %v79, 0
  %vm106 = vcmask 1043456
  %v108 = vsel %vm106, %v80, 0
  %110 = vmatpush.bf16.msra.mxu0 0
  %111 = vmatpush.bf16.msra.mxu0 0
  %112 = vmatpush.bf16.msra.mxu0 0
  %113 = vmatpush.bf16.msra.mxu0 0
  %114 = vmatpush.bf16.msra.mxu0 0
  %115 = vmatpush.bf16.msra.mxu0 0
  %116 = vmatpush.bf16.msra.mxu0 0
  %117 = vmatpush.bf16.msra.mxu0 %v108
  %118 = vmatmul.bf16.gmra.mxu0 %v83
  %v119 = vpop.f32.mrf.mxu0
  %v120 = vadd.f32 0.0, %v119
  %v121 = vpop.f32.mrf.mxu0
  %v122 = vadd.f32 0.0, %v121
  %123 = vmatmul.bf16.gmra.mxu0 %v86
  %v124 = vpop.f32.mrf.mxu0
  %v125 = vadd.f32 0.0, %v124
  %v126 = vpop.f32.mrf.mxu0
  %v127 = vadd.f32 0.0, %v126
  %128 = vmatmul.bf16.gmra.mxu0 %v89
  %v129 = vpop.f32.mrf.mxu0
  %v130 = vadd.f32 0.0, %v129
  %v131 = vpop.f32.mrf.mxu0
  %v132 = vadd.f32 0.0, %v131
  %133 = vmatmul.bf16.gmra.mxu0 %v92
  %v134 = vpop.f32.mrf.mxu0
  %v135 = vadd.f32 0.0, %v134
  %v136 = vpop.f32.mrf.mxu0
  %v137 = vadd.f32 0.0, %v136
  %138 = vmatmul.bf16.gmra.mxu0 %v95
  %v139 = vpop.f32.mrf.mxu0
  %v140 = vadd.f32 0.0, %v139
  %v141 = vpop.f32.mrf.mxu0
  %v142 = vadd.f32 0.0, %v141
  %143 = vmatmul.bf16.gmra.mxu0 %v98
  %v144 = vpop.f32.mrf.mxu0
  %v145 = vadd.f32 0.0, %v144
  %v146 = vpop.f32.mrf.mxu0
  %v147 = vadd.f32 0.0, %v146
  %148 = vmatmul.bf16.gmra.mxu0 %v101
  %v149 = vpop.f32.mrf.mxu0
  %v150 = vadd.f32 0.0, %v149
  %v151 = vpop.f32.mrf.mxu0
  %v152 = vadd.f32 0.0, %v151
  %153 = vmatmul.bf16.gmra.mxu0 %v104
  %v154 = vpop.f32.mrf.mxu0
  %v155 = vadd.f32 0.0, %v154
  %v156 = vpop.f32.mrf.mxu0
  %v157 = vadd.f32 0.0, %v156
  %158 = vdwg.mxu0
  %v161 = vunpack.c.l.b16 %v54
  %v162 = vunpack.c.l.b16 %v55
  %v163 = vpack.c.b16 %v162, %v161
  %vm165 = vcmask 130048
  %v167 = vsel %vm165, %v46, 0
  %v170 = vsel %vm165, %v47, 0
  %v173 = vsel %vm165, %v48, 0
  %v176 = vsel %vm165, %v49, 0
  %v179 = vsel %vm165, %v50, 0
  %v182 = vsel %vm165, %v51, 0
  %v185 = vsel %vm165, %v52, 0
  %v188 = vsel %vm165, %v53, 0
  %190 = vmatpush.bf16.msra.mxu0 0
  %191 = vmatpush.bf16.msra.mxu0 0
  %192 = vmatpush.bf16.msra.mxu0 0
  %193 = vmatpush.bf16.msra.mxu0 0
  %194 = vmatpush.bf16.msra.mxu0 0
  %195 = vmatpush.bf16.msra.mxu0 0
  %196 = vmatpush.bf16.msra.mxu0 0
  %197 = vmatpush.bf16.msra.mxu0 %v163
  %198 = vmatmul.bf16.gmra.mxu0 %v167
  %v199 = vpop.f32.mrf.mxu0
  %v200 = vadd.f32 %v120, %v199
  %v201 = vpop.f32.mrf.mxu0
  %v202 = vadd.f32 %v122, %v201
  %203 = vmatmul.bf16.gmra.mxu0 %v170
  %v204 = vpop.f32.mrf.mxu0
  %v205 = vadd.f32 %v125, %v204
  %v206 = vpop.f32.mrf.mxu0
  %v207 = vadd.f32 %v127, %v206
  %208 = vmatmul.bf16.gmra.mxu0 %v173
  %v209 = vpop.f32.mrf.mxu0
  %v210 = vadd.f32 %v130, %v209
  %v211 = vpop.f32.mrf.mxu0
  %v212 = vadd.f32 %v132, %v211
  %213 = vmatmul.bf16.gmra.mxu0 %v176
  %v214 = vpop.f32.mrf.mxu0
  %v215 = vadd.f32 %v135, %v214
  %v216 = vpop.f32.mrf.mxu0
  %v217 = vadd.f32 %v137, %v216
  %218 = vmatmul.bf16.gmra.mxu0 %v179
  %v219 = vpop.f32.mrf.mxu0
  %v220 = vadd.f32 %v140, %v219
  %v221 = vpop.f32.mrf.mxu0
  %v222 = vadd.f32 %v142, %v221
  %223 = vmatmul.bf16.gmra.mxu0 %v182
  %v224 = vpop.f32.mrf.mxu0
  %v225 = vadd.f32 %v145, %v224
  %v226 = vpop.f32.mrf.mxu0
  %v227 = vadd.f32 %v147, %v226
  %228 = vmatmul.bf16.gmra.mxu0 %v185
  %v229 = vpop.f32.mrf.mxu0
  %v230 = vadd.f32 %v150, %v229
  %v231 = vpop.f32.mrf.mxu0
  %v232 = vadd.f32 %v152, %v231
  %233 = vmatmul.bf16.gmra.mxu0 %v188
  %v234 = vpop.f32.mrf.mxu0
  %v235 = vadd.f32 %v155, %v234
  %v236 = vpop.f32.mrf.mxu0
  %v237 = vadd.f32 %v157, %v236
  %238 = vdwg.mxu0
  %v239 = vld [vmem:[%s4] sm:$0x1]
  %v241 = vperm.slane %v239, 0
  %v243 = vadd.f32 %v200, %v241
  %v244 = vadd.f32 %v202, %v241
  %v245 = vadd.f32 %v205, %v241
  %v246 = vadd.f32 %v207, %v241
  %v247 = vadd.f32 %v210, %v241
  %v248 = vadd.f32 %v212, %v241
  %v249 = vadd.f32 %v215, %v241
  %v250 = vadd.f32 %v217, %v241
  %v251 = vadd.f32 %v220, %v241
  %v252 = vadd.f32 %v222, %v241
  %v253 = vadd.f32 %v225, %v241
  %v254 = vadd.f32 %v227, %v241
  %v255 = vadd.f32 %v230, %v241
  %v256 = vadd.f32 %v232, %v241
  %v257 = vadd.f32 %v235, %v241
  %v258 = vadd.f32 %v237, %v241
  %v259 = vmax.f32 %v243, 0.0
  %v260 = vmax.f32 %v244, 0.0
  %v261 = vmax.f32 %v245, 0.0
  %v262 = vmax.f32 %v246, 0.0
  %v263 = vmax.f32 %v247, 0.0
  %v264 = vmax.f32 %v248, 0.0
  %v265 = vmax.f32 %v249, 0.0
  %v266 = vmax.f32 %v250, 0.0
  %v267 = vmax.f32 %v251, 0.0
  %v268 = vmax.f32 %v252, 0.0
  %v269 = vmax.f32 %v253, 0.0
  %v270 = vmax.f32 %v254, 0.0
  %v271 = vmax.f32 %v255, 0.0
  %v272 = vmax.f32 %v256, 0.0
  %v273 = vmax.f32 %v257, 0.0
  %v274 = vmax.f32 %v258, 0.0
  %v275 = vpack.c.bf16 %v260, %v259
  %v276 = vpack.c.bf16 %v262, %v261
  %v277 = vpack.c.bf16 %v264, %v263
  %v278 = vpack.c.bf16 %v266, %v265
  %v279 = vpack.c.bf16 %v268, %v267
  %v280 = vpack.c.bf16 %v270, %v269
  %v281 = vpack.c.bf16 %v272, %v271
  %v282 = vpack.c.bf16 %v274, %v273
  %v283 = vld [vmem:[%s5] sm:$0xf]
  %v284 = vld [vmem:[%s5 + $0x4] sm:$0xf]
  %v285 = vld [vmem:[%s5 + $0x8] sm:$0xf]
  %v286 = vld [vmem:[%s5 + $0xc] sm:$0xf]
  %v287 = vld [vmem:[%s6] sm:$0x1]
  %v289 = vperm.slane %v287, 0
  %v295 = vunpack.c.l.b16 %v283
  %v296 = vunpack.c.l.b16 %v284
  %v297 = vunpack.c.l.b16 %v285
  %v298 = vunpack.c.l.b16 %v286
  %v299 = vpack.c.b16 %v296, %v295
  %v300 = vpack.c.b16 %v298, %v297
  %vm303 = vcmask 261120
  %v305 = vsel %vm303, %v275, 0
  %v308 = vsel %vm303, %v276, 0
  %v311 = vsel %vm303, %v277, 0
  %v314 = vsel %vm303, %v278, 0
  %v317 = vsel %vm303, %v279, 0
  %v320 = vsel %vm303, %v280, 0
  %v323 = vsel %vm303, %v281, 0
  %v326 = vsel %vm303, %v282, 0
  %328 = vmatpush.bf16.msra.mxu0 0
  %329 = vmatpush.bf16.msra.mxu0 0
  %330 = vmatpush.bf16.msra.mxu0 0
  %331 = vmatpush.bf16.msra.mxu0 0
  %332 = vmatpush.bf16.msra.mxu0 0
  %333 = vmatpush.bf16.msra.mxu0 0
  %334 = vmatpush.bf16.msra.mxu0 %v300
  %335 = vmatpush.bf16.msra.mxu0 %v299
  %336 = vmatmul.bf16.gmra.mxu0 %v305
  %v337 = vpop.f32.mrf.mxu0
  %v338 = vadd.f32 %v289, %v337
  %v339 = vpop.f32.mrf.mxu0
  %v340 = vadd.f32 %v289, %v339
  %341 = vmatmul.bf16.gmra.mxu0 %v308
  %v342 = vpop.f32.mrf.mxu0
  %v343 = vadd.f32 %v289, %v342
  %v344 = vpop.f32.mrf.mxu0
  %v345 = vadd.f32 %v289, %v344
  %346 = vmatmul.bf16.gmra.mxu0 %v311
  %v347 = vpop.f32.mrf.mxu0
  %v348 = vadd.f32 %v289, %v347
  %v349 = vpop.f32.mrf.mxu0
  %v350 = vadd.f32 %v289, %v349
  %351 = vmatmul.bf16.gmra.mxu0 %v314
  %v352 = vpop.f32.mrf.mxu0
  %v353 = vadd.f32 %v289, %v352
  %v354 = vpop.f32.mrf.mxu0
  %v355 = vadd.f32 %v289, %v354
  %356 = vmatmul.bf16.gmra.mxu0 %v317
  %v357 = vpop.f32.mrf.mxu0
  %v358 = vadd.f32 %v289, %v357
  %v359 = vpop.f32.mrf.mxu0
  %v360 = vadd.f32 %v289, %v359
  %361 = vmatmul.bf16.gmra.mxu0 %v320
  %v362 = vpop.f32.mrf.mxu0
  %v363 = vadd.f32 %v289, %v362
  %v364 = vpop.f32.mrf.mxu0
  %v365 = vadd.f32 %v289, %v364
  %366 = vmatmul.bf16.gmra.mxu0 %v323
  %v367 = vpop.f32.mrf.mxu0
  %v368 = vadd.f32 %v289, %v367
  %v369 = vpop.f32.mrf.mxu0
  %v370 = vadd.f32 %v289, %v369
  %371 = vmatmul.bf16.gmra.mxu0 %v326
  %v372 = vpop.f32.mrf.mxu0
  %v373 = vadd.f32 %v289, %v372
  %v374 = vpop.f32.mrf.mxu0
  %v375 = vadd.f32 %v289, %v374
  %376 = vdwg.mxu0
  %v377 = vmax.f32 %v338, 0.0
  %v378 = vmax.f32 %v340, 0.0
  %v379 = vmax.f32 %v343, 0.0
  %v380 = vmax.f32 %v345, 0.0
  %v381 = vmax.f32 %v348, 0.0
  %v382 = vmax.f32 %v350, 0.0
  %v383 = vmax.f32 %v353, 0.0
  %v384 = vmax.f32 %v355, 0.0
  %v385 = vmax.f32 %v358, 0.0
  %v386 = vmax.f32 %v360, 0.0
  %v387 = vmax.f32 %v363, 0.0
  %v388 = vmax.f32 %v365, 0.0
  %v389 = vmax.f32 %v368, 0.0
  %v390 = vmax.f32 %v370, 0.0
  %v391 = vmax.f32 %v373, 0.0
  %v392 = vmax.f32 %v375, 0.0
  %v393 = vld [vmem:[%s7] sm:$0x1]
  %v395 = vperm.slane %v393, 0
  %v397 = vmul.f32 %v377, %v395
  %v398 = vmul.f32 %v378, %v395
  %v399 = vmul.f32 %v379, %v395
  %v400 = vmul.f32 %v380, %v395
  %v401 = vmul.f32 %v381, %v395
  %v402 = vmul.f32 %v382, %v395
  %v403 = vmul.f32 %v383, %v395
  %v404 = vmul.f32 %v384, %v395
  %v405 = vmul.f32 %v385, %v395
  %v406 = vmul.f32 %v386, %v395
  %v407 = vmul.f32 %v387, %v395
  %v408 = vmul.f32 %v388, %v395
  %v409 = vmul.f32 %v389, %v395
  %v410 = vmul.f32 %v390, %v395
  %v411 = vmul.f32 %v391, %v395
  %v412 = vmul.f32 %v392, %v395
  %v413 = vsel %vm303, %v397, 0.0
  %414 = vadd.xlane.f32.xlu0 %v413
  %v415 = vpop.xlane.xlu0 %414
  %v416 = vsel %vm303, %v398, 0.0
  %417 = vadd.xlane.f32.xlu0 %v416
  %v418 = vpop.xlane.xlu0 %417
  %v419 = vsel %vm303, %v399, 0.0
  %420 = vadd.xlane.f32.xlu0 %v419
  %v421 = vpop.xlane.xlu0 %420
  %v422 = vsel %vm303, %v400, 0.0
  %423 = vadd.xlane.f32.xlu0 %v422
  %v424 = vpop.xlane.xlu0 %423
  %v425 = vsel %vm303, %v401, 0.0
  %426 = vadd.xlane.f32.xlu0 %v425
  %v427 = vpop.xlane.xlu0 %426
  %v428 = vsel %vm303, %v402, 0.0
  %429 = vadd.xlane.f32.xlu0 %v428
  %v430 = vpop.xlane.xlu0 %429
  %v431 = vsel %vm303, %v403, 0.0
  %432 = vadd.xlane.f32.xlu0 %v431
  %v433 = vpop.xlane.xlu0 %432
  %v434 = vsel %vm303, %v404, 0.0
  %435 = vadd.xlane.f32.xlu0 %v434
  %v436 = vpop.xlane.xlu0 %435
  %v437 = vsel %vm303, %v405, 0.0
  %438 = vadd.xlane.f32.xlu0 %v437
  %v439 = vpop.xlane.xlu0 %438
  %v440 = vsel %vm303, %v406, 0.0
  %441 = vadd.xlane.f32.xlu0 %v440
  %v442 = vpop.xlane.xlu0 %441
  %v443 = vsel %vm303, %v407, 0.0
  %444 = vadd.xlane.f32.xlu0 %v443
  %v445 = vpop.xlane.xlu0 %444
  %v446 = vsel %vm303, %v408, 0.0
  %447 = vadd.xlane.f32.xlu0 %v446
  %v448 = vpop.xlane.xlu0 %447
  %v449 = vsel %vm303, %v409, 0.0
  %450 = vadd.xlane.f32.xlu0 %v449
  %v451 = vpop.xlane.xlu0 %450
  %v452 = vsel %vm303, %v410, 0.0
  %453 = vadd.xlane.f32.xlu0 %v452
  %v454 = vpop.xlane.xlu0 %453
  %v455 = vsel %vm303, %v411, 0.0
  %456 = vadd.xlane.f32.xlu0 %v455
  %v457 = vpop.xlane.xlu0 %456
  %v458 = vsel %vm303, %v412, 0.0
  %459 = vadd.xlane.f32.xlu0 %v458
  %v460 = vpop.xlane.xlu0 %459
  %vm461 = vcmask 7168
  %462 = vst.msk [vmem:[%s8] sm:$0xff] %vm461, %v415
  %463 = vst.msk [vmem:[%s8 + $0x8] sm:$0xff] %vm461, %v418
  %464 = vst.msk [vmem:[%s8 + $0x10] sm:$0xff] %vm461, %v421
  %465 = vst.msk [vmem:[%s8 + $0x18] sm:$0xff] %vm461, %v424
  %466 = vst.msk [vmem:[%s8 + $0x20] sm:$0xff] %vm461, %v427
  %467 = vst.msk [vmem:[%s8 + $0x28] sm:$0xff] %vm461, %v430
  %468 = vst.msk [vmem:[%s8 + $0x30] sm:$0xff] %vm461, %v433
  %469 = vst.msk [vmem:[%s8 + $0x38] sm:$0xff] %vm461, %v436
  %470 = vst.msk [vmem:[%s8 + $0x40] sm:$0xff] %vm461, %v439
  %471 = vst.msk [vmem:[%s8 + $0x48] sm:$0xff] %vm461, %v442
  %472 = vst.msk [vmem:[%s8 + $0x50] sm:$0xff] %vm461, %v445
  %473 = vst.msk [vmem:[%s8 + $0x58] sm:$0xff] %vm461, %v448
  %474 = vst.msk [vmem:[%s8 + $0x60] sm:$0xff] %vm461, %v451
  %475 = vst.msk [vmem:[%s8 + $0x68] sm:$0xff] %vm461, %v454
  %476 = vst.msk [vmem:[%s8 + $0x70] sm:$0xff] %vm461, %v457
  %477 = vst.msk [vmem:[%s8 + $0x78] sm:$0xff] %vm461, %v460
  // Predicated region
  $region34: #{critic_forward.1} parent=0 // pred_check
    _
  $region35: #{critic_forward.1} parent=0 // pred_check_branch
    %479 = sbr.rel (0) target = $region37
  $region36: #{critic_forward.1} parent=0 // pred_region
    _
  $region37: #{critic_forward.1} parent=0 // pred_fallthru
    _
  // Predicated region
  $region38: #{critic_forward.1} parent=0 // pred_check
    _
  $region39: #{critic_forward.1} parent=0 // pred_check_branch
    %481 = sbr.rel (0) target = $region41
  $region40: #{critic_forward.1} parent=0 // pred_region
    _
  $region41: #{critic_forward.1} parent=0 // pred_fallthru
    _

</llo_original>
